<compile_context>
chip_gen: v6e
topology: v6e:2x2x1
jax: 0.10.0
libtpu: 0.0.40
codegen_flags: <defaults>
</compile_context>

<pallas_src>
import functools

import jax
import jax.numpy as jnp
import numpy as np
from jax.experimental import pallas as pl
from jax.experimental.pallas import tpu as pltpu


def _attn_block_kernel(x_ref, consts_ref, wvT_ref, out_ref, *, eps, lane_major_softmax):
    """Processes TB batch elements per grid step.

    x_ref:      (TB, L, D)  input embeddings for this batch tile
    consts_ref: (8, D)      row 0: wk^T wq^T / sqrt(D), row 1: bv, row 2: LN gamma,
                            row 3: LN beta, rows 4-7: zero padding (sublane alignment)
    wvT_ref:    (D, D)      lin_v weight transposed (out = ctx @ wvT + bv); f32 or bf16
    out_ref:    (TB, D)     output tile (lane-dense 2D, multi-sublane)
    """
    d = x_ref.shape[2]
    w_score = consts_ref[0:1, :].reshape(1, 1, d)   # (1, 1, D)
    bv = consts_ref[1:2, :]                         # (1, D)
    gamma = consts_ref[2:3, :]                      # (1, D)
    beta = consts_ref[3:4, :]                       # (1, D)

    # --- attention scores: K/Q folded into one length-D vector (bias cancels in softmax).
    # x is read per-pass (not bound once) so Mosaic keeps live ranges short at large TB.
    if lane_major_softmax:
        # Lane-major softmax for large L: exp runs 128-lanes-wide through the EUP and the
        # max/sum reductions are lane reduces; the tiny (TB, L) relayout back to column
        # form is trivial.  Statically selected, so small-L builds never compile this path.
        s = jnp.sum(x_ref[...] * w_score, axis=2)                        # (TB, L)
        s = s - jnp.max(s, axis=1, keepdims=True)
        p = jnp.exp(s)
        denom = jnp.sum(p, axis=1, keepdims=True)                        # (TB, 1)
        attn = (p * pl.reciprocal(denom, approx=False))[:, :, None]      # (TB, L, 1)
    else:
        # Column layout for small L: attention weights are immediately re-broadcast against
        # x along L (sublanes), so a lane-major softmax would just add a relayout round-trip.
        s = jnp.sum(x_ref[...] * w_score, axis=2, keepdims=True)         # (TB, L, 1)
        s = s - jnp.max(s, axis=1, keepdims=True)
        p = jnp.exp(s)
        denom = jnp.sum(p, axis=1, keepdims=True)                        # (TB, 1, 1)
        # approx=True would move the divide to the EUP (free slot) but breaks rtol=1e-5.
        attn = p * pl.reciprocal(denom, approx=False)                    # (TB, L, 1)

    # --- attention-weighted context and residual mean in one (short-lived) pass over x.
    xr = x_ref[...]                                                      # (TB, L, D)
    ctx = jnp.sum(attn * xr, axis=1)                                     # (TB, D)
    xmean = jnp.mean(xr, axis=1)                                         # (TB, D)

    # --- affine V projection on the already-reduced (TB, D) context:
    # attn^T (x Wv^T + bv) == (attn^T x) Wv^T + bv  because sum(attn) == 1.
    # ctx is cast to wvT's dtype: no-op for f32, bf16 MXU inputs when use_bf16_matmul=True.
    out = jnp.dot(ctx.astype(wvT_ref.dtype), wvT_ref[...],
                  preferred_element_type=jnp.float32) + bv               # (TB, D)

    # dropout(p=0.1): identity at inference.
    # TODO(synk): training-mode dropout (random mask + 1/0.9 scale) not implemented.

    # Residual with mean over the sequence, then LayerNorm over D (lanes).
    y = xmean + out                                                      # (TB, D)
    mu = jnp.mean(y, axis=1, keepdims=True)
    var = jnp.mean((y - mu) ** 2, axis=1, keepdims=True)
    y = (y - mu) * jax.lax.rsqrt(var + eps)
    out_ref[...] = (y * gamma + beta).astype(out_ref.dtype)


def _physical_vmem_bytes():
    """Best-effort physical-VMEM query; falls back to the smallest per-core figure (v7x)."""
    try:
        info = pltpu.get_tpu_info()
        for attr in ("vmem_capacity_bytes", "vmem_size_bytes", "vmem_bytes"):
            v = getattr(info, attr, None)
            if v:
                return int(v)
    except Exception:
        pass
    return 64 * 1024 * 1024


def _choose_tiling(n, l, d, *, budget_bytes, x_bytes=4, w_bytes=4, out_bytes=4):
    """Pick (TB, N_padded) so that the double-buffered pipeline footprint fits budget_bytes,
    TB is a multiple of 8 sublanes, and the grid has an even number of steps >= 2 (both v7x
    TensorCores get equal work).  N is padded up to a multiple of TB (wrapper slices back)."""
    per_row = 2 * (l * d * x_bytes + d * out_bytes)        # x tile + out tile, double-buffered
    fixed = 2 * (d * d * w_bytes + 8 * d * 4)              # wvT + packed consts (conservative:
                                                           # counted as double-buffered)
    cap = (budget_bytes - fixed) // per_row
    cap = int(max((cap // 8) * 8, 8))                      # >= 8 rows, multiple of 8 sublanes

    n8 = -(-n // 8) * 8                                    # batch padded to a sublane multiple
    if n8 <= 8:
        return 8, 8                                        # a single minimal tile; nothing to split
    steps = max(-(-n8 // cap), 2)                          # at least 2 grid steps
    steps += steps % 2                                     # even step count for the 2-TC v7x
    tb = (-(-n8 // steps) + 7) // 8 * 8                    # biggest tile for that step count
    return tb, steps * tb


def many_to_one_attention_block(x, params, *, eps=1e-5, use_bf16_matmul=False):
    """x: (N, L, D) float32. Returns (N, D)."""
    N, L, D = x.shape
    inv_sqrt_d = 1.0 / np.sqrt(np.float32(D))

    # Fold lin_k into a single length-D scoring vector (exact rewrite; the scalar bias term
    # (bk @ wq^T + bq)/sqrt(D) is constant across tokens and cancels in the softmax), and
    # pack all constant (.,D) vectors into one sublane-aligned (8, D) operand.
    w_score = (params["wk"].T @ params["wq"].T).reshape(-1) * inv_sqrt_d          # (D,)
    consts = jnp.stack(
        [w_score.astype(jnp.float32),
         params["bv"].astype(jnp.float32),
         params["ln_w"].astype(jnp.float32),
         params["ln_b"].astype(jnp.float32)], axis=0)                             # (4, D)
    consts = jnp.pad(consts, ((0, 4), (0, 0)))                                    # (8, D)

    wvT = params["wv"].T                                                          # (D, D)
    if use_bf16_matmul:
        # Halves the DxD weight DMA and its double-buffered VMEM and avoids fp32 MXU
        # multi-pass decomposition; accumulation stays f32.  Breaks rtol=1e-5, so opt-in.
        wvT = wvT.astype(jnp.bfloat16)

    phys_vmem = _physical_vmem_bytes()
    budget = int(phys_vmem * 0.40)            # pipeline-buffer budget; leaves scratch headroom
    vmem_limit = int(min(phys_vmem * 0.60, 112 * 1024 * 1024))

    TB, n_pad = _choose_tiling(
        N, L, D, budget_bytes=budget,
        x_bytes=int(jnp.dtype(x.dtype).itemsize),
        w_bytes=int(jnp.dtype(wvT.dtype).itemsize),
        out_bytes=int(jnp.dtype(x.dtype).itemsize))

    x_in = x if n_pad == N else jnp.pad(x, ((0, n_pad - N), (0, 0), (0, 0)))
    grid = (n_pad // TB,)

    cost = pl.CostEstimate(
        flops=int(2 * n_pad * L * D        # folded score matvec
                  + 3 * n_pad * L * D      # attention-weighted context + residual mean
                  + 2 * n_pad * D * D      # V projection
                  + 10 * n_pad * D),       # LayerNorm elementwise
        transcendentals=int(n_pad * L + 2 * n_pad),
        bytes_accessed=int(jnp.dtype(x.dtype).itemsize * n_pad * L * D
                           + jnp.dtype(x.dtype).itemsize * n_pad * D
                           + jnp.dtype(wvT.dtype).itemsize * D * D
                           + 4 * 8 * D),
    )

    kernel = functools.partial(_attn_block_kernel, eps=eps,
                               lane_major_softmax=(L >= 256))

    out = pl.pallas_call(
        kernel,
        out_shape=jax.ShapeDtypeStruct((n_pad, D), x.dtype),
        grid_spec=pltpu.PrefetchScalarGridSpec(
            num_scalar_prefetch=0,
            grid=grid,
            in_specs=[
                pl.BlockSpec((TB, L, D), lambda n: (n, 0, 0)),   # x tile
                pl.BlockSpec((8, D), lambda n: (0, 0)),          # packed constant vectors
                pl.BlockSpec((D, D), lambda n: (0, 0)),          # wvT
            ],
            out_specs=pl.BlockSpec((TB, D), lambda n: (n, 0)),   # lane-dense 2D output
        ),
        compiler_params=pltpu.CompilerParams(
            dimension_semantics=("parallel",),
            vmem_limit_bytes=vmem_limit,
        ),
        cost_estimate=cost,
    )(x_in, consts, wvT)
    return out if n_pad == N else out[:N]


def reference(x, params, *, eps=1e-5):
    """Pure-JAX reference mirroring the PyTorch forward (inference mode), unfused."""
    N, L, D = x.shape
    k = x @ params["wk"].T + params["bk"]
    scores = (k @ params["wq"].T + params["bq"]) / jnp.sqrt(jnp.float32(D))   # (N, L, 1)
    attn = jax.nn.softmax(scores, axis=1)
    v = x @ params["wv"].T + params["bv"]
    out = jnp.sum(attn * v, axis=1)                                           # (N, D)
    y = jnp.mean(x, axis=1) + out
    mu = jnp.mean(y, axis=-1, keepdims=True)
    var = jnp.mean((y - mu) ** 2, axis=-1, keepdims=True)
    return (y - mu) / jnp.sqrt(var + eps) * params["ln_w"] + params["ln_b"]


def init_params(key, d_model):
    ks = jax.random.split(key, 6)
    s = 1.0 / np.sqrt(d_model)
    return {
        "wq": jax.random.uniform(ks[0], (1, d_model), jnp.float32, -s, s),
        "bq": jax.random.uniform(ks[1], (1,), jnp.float32, -s, s),
        "wk": jax.random.uniform(ks[2], (d_model, d_model), jnp.float32, -s, s),
        "bk": jax.random.uniform(ks[3], (d_model,), jnp.float32, -s, s),
        "wv": jax.random.uniform(ks[4], (d_model, d_model), jnp.float32, -s, s),
        "bv": jax.random.uniform(ks[5], (d_model,), jnp.float32, -s, s),
        "ln_w": jnp.ones((d_model,), jnp.float32),
        "ln_b": jnp.zeros((d_model,), jnp.float32),
    }


if __name__ == "__main__":
    # Small shapes consistent with the module: N batch elements, sequence L, d_model D.
    key = jax.random.PRNGKey(0)
    kx, kp, kx2 = jax.random.split(key, 3)

    # N=16 exercises the batched path with an even 2-step grid (TB=8).
    N, L, D = 16, 16, 32
    x = jax.random.normal(kx, (N, L, D), jnp.float32)
    params = init_params(kp, D)

    out = jax.block_until_ready(many_to_one_attention_block(x, params))
    ref = jax.block_until_ready(reference(x, params))
    np.testing.assert_allclose(np.asarray(out), np.asarray(ref), rtol=1e-5, atol=1e-5)

    # Awkward batch (not a multiple of 8) exercises the zero-pad + slice path.
    x2 = jax.random.normal(kx2, (12, L, D), jnp.float32)
    out2 = jax.block_until_ready(many_to_one_attention_block(x2, params))
    ref2 = jax.block_until_ready(reference(x2, params))
    np.testing.assert_allclose(np.asarray(out2), np.asarray(ref2), rtol=1e-5, atol=1e-5)

    print("KERNEL_OK")
</pallas_src>

<mosaic_0001>
module attributes {stable_mosaic.version = 11 : i64} {
  func.func @_attn_block_kernel(%arg0: i32, %arg1: memref<8x16x32xf32, #tpu.memory_space<vmem>>, %arg2: memref<8x32xf32, #tpu.memory_space<vmem>>, %arg3: memref<32x32xf32, #tpu.memory_space<vmem>>, %arg4: memref<8x32xf32, #tpu.memory_space<vmem>>) attributes {dimension_semantics = [#tpu.dimension_semantics<parallel>], iteration_bounds = array<i64: 2>, scalar_prefetch = 0 : i64, scratch_operands = 0 : i64, tpu.core_type = #tpu.core_type<tc>, window_params = [{transform_indices = @transform_0, window_bounds = array<i64: 8, 16, 32>}, {pipeline_mode = #tpu.pipeline_mode<synchronous>, transform_indices = @transform_1, window_bounds = array<i64: 8, 32>}, {pipeline_mode = #tpu.pipeline_mode<synchronous>, transform_indices = @transform_2, window_bounds = array<i64: 32, 32>}, {transform_indices = @transform_3, window_bounds = array<i64: 8, 32>}]} {
    %c0 = arith.constant 0 : index
    %c0_0 = arith.constant 0 : index
    %0 = vector.load %arg2[%c0, %c0_0] : memref<8x32xf32, #tpu.memory_space<vmem>>, vector<1x32xf32>
    %1 = vector.shape_cast %0 : vector<1x32xf32> to vector<1x1x32xf32>
    %c1 = arith.constant 1 : index
    %c0_1 = arith.constant 0 : index
    %2 = vector.load %arg2[%c1, %c0_1] : memref<8x32xf32, #tpu.memory_space<vmem>>, vector<1x32xf32>
    %c2 = arith.constant 2 : index
    %c0_2 = arith.constant 0 : index
    %3 = vector.load %arg2[%c2, %c0_2] : memref<8x32xf32, #tpu.memory_space<vmem>>, vector<1x32xf32>
    %c3 = arith.constant 3 : index
    %c0_3 = arith.constant 0 : index
    %4 = vector.load %arg2[%c3, %c0_3] : memref<8x32xf32, #tpu.memory_space<vmem>>, vector<1x32xf32>
    %c0_4 = arith.constant 0 : index
    %c0_5 = arith.constant 0 : index
    %c0_6 = arith.constant 0 : index
    %5 = vector.load %arg1[%c0_4, %c0_5, %c0_6] : memref<8x16x32xf32, #tpu.memory_space<vmem>>, vector<8x16x32xf32>
    %6 = vector.broadcast %1 : vector<1x1x32xf32> to vector<8x16x32xf32>
    %7 = arith.mulf %5, %6 : vector<8x16x32xf32>
    %cst = arith.constant dense<0.000000e+00> : vector<8x16xf32>
    %8 = vector.multi_reduction <add>, %7, %cst [2] : vector<8x16x32xf32> to vector<8x16xf32>
    %9 = vector.shape_cast %8 : vector<8x16xf32> to vector<8x16x1xf32>
    %cst_7 = arith.constant dense<0xFF800000> : vector<8x1xf32>
    %10 = vector.multi_reduction <maximumf>, %9, %cst_7 [1] : vector<8x16x1xf32> to vector<8x1xf32>
    %11 = vector.shape_cast %10 : vector<8x1xf32> to vector<8x1x1xf32>
    %12 = vector.broadcast %11 : vector<8x1x1xf32> to vector<8x16x1xf32>
    %13 = arith.subf %9, %12 : vector<8x16x1xf32>
    %14 = math.exp %13 : vector<8x16x1xf32>
    %cst_8 = arith.constant dense<0.000000e+00> : vector<8x1xf32>
    %15 = vector.multi_reduction <add>, %14, %cst_8 [1] : vector<8x16x1xf32> to vector<8x1xf32>
    %16 = vector.shape_cast %15 : vector<8x1xf32> to vector<8x1x1xf32>
    %17 = tpu.reciprocal %16 : vector<8x1x1xf32> -> vector<8x1x1xf32>
    %18 = vector.broadcast %17 : vector<8x1x1xf32> to vector<8x16x1xf32>
    %19 = arith.mulf %14, %18 : vector<8x16x1xf32>
    %c0_9 = arith.constant 0 : index
    %c0_10 = arith.constant 0 : index
    %c0_11 = arith.constant 0 : index
    %20 = vector.load %arg1[%c0_9, %c0_10, %c0_11] : memref<8x16x32xf32, #tpu.memory_space<vmem>>, vector<8x16x32xf32>
    %21 = vector.broadcast %19 : vector<8x16x1xf32> to vector<8x16x32xf32>
    %22 = arith.mulf %21, %20 : vector<8x16x32xf32>
    %cst_12 = arith.constant dense<0.000000e+00> : vector<8x32xf32>
    %23 = vector.multi_reduction <add>, %22, %cst_12 [1] : vector<8x16x32xf32> to vector<8x32xf32>
    %cst_13 = arith.constant dense<0.000000e+00> : vector<8x32xf32>
    %24 = vector.multi_reduction <add>, %20, %cst_13 [1] : vector<8x16x32xf32> to vector<8x32xf32>
    %cst_14 = arith.constant 1.600000e+01 : f32
    %25 = vector.broadcast %cst_14 : f32 to vector<8x32xf32>
    %26 = arith.divf %24, %25 : vector<8x32xf32>
    %c0_15 = arith.constant 0 : index
    %c0_16 = arith.constant 0 : index
    %27 = vector.load %arg3[%c0_15, %c0_16] : memref<32x32xf32, #tpu.memory_space<vmem>>, vector<32x32xf32>
    %cst_17 = arith.constant dense<0.000000e+00> : vector<8x32xf32>
    %28 = tpu.matmul %23, %27, %cst_17 {dimension_numbers = #tpu.dot_dimension_numbers<[1], [0], [0], [1], [0, 0, 1, 1], [], []>} : vector<8x32xf32>, vector<32x32xf32>, vector<8x32xf32> -> vector<8x32xf32>
    %29 = vector.broadcast %2 : vector<1x32xf32> to vector<8x32xf32>
    %30 = arith.addf %28, %29 : vector<8x32xf32>
    %31 = arith.addf %26, %30 : vector<8x32xf32>
    %cst_18 = arith.constant dense<0.000000e+00> : vector<8xf32>
    %32 = vector.multi_reduction <add>, %31, %cst_18 [1] : vector<8x32xf32> to vector<8xf32>
    %33 = vector.shape_cast %32 : vector<8xf32> to vector<8x1xf32>
    %cst_19 = arith.constant 3.200000e+01 : f32
    %34 = vector.broadcast %cst_19 : f32 to vector<8x1xf32>
    %35 = arith.divf %33, %34 : vector<8x1xf32>
    %36 = vector.broadcast %35 : vector<8x1xf32> to vector<8x32xf32>
    %37 = arith.subf %31, %36 : vector<8x32xf32>
    %38 = arith.mulf %37, %37 : vector<8x32xf32>
    %cst_20 = arith.constant dense<0.000000e+00> : vector<8xf32>
    %39 = vector.multi_reduction <add>, %38, %cst_20 [1] : vector<8x32xf32> to vector<8xf32>
    %40 = vector.shape_cast %39 : vector<8xf32> to vector<8x1xf32>
    %cst_21 = arith.constant 3.200000e+01 : f32
    %41 = vector.broadcast %cst_21 : f32 to vector<8x1xf32>
    %42 = arith.divf %40, %41 : vector<8x1xf32>
    %43 = vector.broadcast %35 : vector<8x1xf32> to vector<8x32xf32>
    %44 = arith.subf %31, %43 : vector<8x32xf32>
    %cst_22 = arith.constant 9.99999974E-6 : f32
    %45 = vector.broadcast %cst_22 : f32 to vector<8x1xf32>
    %46 = arith.addf %42, %45 : vector<8x1xf32>
    %47 = math.rsqrt %46 : vector<8x1xf32>
    %48 = vector.broadcast %47 : vector<8x1xf32> to vector<8x32xf32>
    %49 = arith.mulf %44, %48 : vector<8x32xf32>
    %50 = vector.broadcast %3 : vector<1x32xf32> to vector<8x32xf32>
    %51 = arith.mulf %49, %50 : vector<8x32xf32>
    %52 = vector.broadcast %4 : vector<1x32xf32> to vector<8x32xf32>
    %53 = arith.addf %51, %52 : vector<8x32xf32>
    %c0_23 = arith.constant 0 : index
    %c0_24 = arith.constant 0 : index
    %54 = vector.load %arg4[%c0_23, %c0_24] : memref<8x32xf32, #tpu.memory_space<vmem>>, vector<8x32xf32>
    tpu.vector_store %arg4[%c0_23, %c0_24], %53 {strides = array<i32>} : memref<8x32xf32, #tpu.memory_space<vmem>>, vector<8x32xf32>,
    return
  }
  func.func @transform_0(%arg0: i32) -> (i32, i32, i32) {
    %c0_i32 = arith.constant 0 : i32
    %c0_i32_0 = arith.constant 0 : i32
    %c0_i32_1 = arith.constant 0 : i32
    return %arg0, %c0_i32, %c0_i32_0 : i32, i32, i32
  }
  func.func @transform_1(%arg0: i32) -> (i32, i32) {
    %c0_i32 = arith.constant 0 : i32
    %c0_i32_0 = arith.constant 0 : i32
    %c0_i32_1 = arith.constant 0 : i32
    return %c0_i32, %c0_i32_0 : i32, i32
  }
  func.func @transform_2(%arg0: i32) -> (i32, i32) {
    %c0_i32 = arith.constant 0 : i32
    %c0_i32_0 = arith.constant 0 : i32
    %c0_i32_1 = arith.constant 0 : i32
    return %c0_i32, %c0_i32_0 : i32, i32
  }
  func.func @transform_3(%arg0: i32) -> (i32, i32) {
    %c0_i32 = arith.constant 0 : i32
    %c0_i32_0 = arith.constant 0 : i32
    return %arg0, %c0_i32 : i32, i32
  }
}

</mosaic_0001>

<llo_original>
// kernel: tpu_custom_call.1
$region0: #{tpu_custom_call.1}
  #allocation0 [shape = 'u32[]', space=smem, size = 0x4, offset = 0x4, fixed_abs, tag = 'smem constant byte address 0x4 - core index']
  #allocation1 [shape = 'u32[144,128]{1,0:T(1,128)}', space=vmem, size = 0x12000, scoped, tag = 'internal scratch']
  %s0 = inlined_call_operand.hbm [shape: f32[16,16,32], index: 0, kind: input, shape index: {}]
  %s1 = inlined_call_operand.hbm [shape: f32[8,32], index: 1, kind: input, shape index: {}]
  %s2 = inlined_call_operand.hbm [shape: f32[32,32], index: 2, kind: input, shape index: {}]
  %s3 = inlined_call_operand.hbm [shape: f32[16,32], index: 3, kind: output, shape index: {}]
  %s4 = sld [smem:[#allocation0]]
  $region57: #{tpu_custom_call.1} parent=0
    _
  %s6 = ssub.s32 1, %s4
  %s7 = scalar_select 0, %s6, %s4
  $region1: #{tpu_custom_call.1} parent=0
    #allocation2 [shape = 'u8[131072]{0}', space=vmem, size = 0x20000, scoped, tag = 'input window, operand 0']
    #allocation3 [shape = 's32[2]{0}', space=sflag, size = 0x8, scoped, tag = 'scoped memory for tpu_custom_call.1']
    #allocation4 [shape = 's32[2]{0}', space=sflag, size = 0x8, scoped, tag = 'scoped memory for tpu_custom_call.1']
    #allocation5 [shape = 'u8[4096]{0}', space=vmem, size = 0x1000, scoped, tag = 'input window, operand 1, single buffered']
    #allocation6 [shape = 's32[1]{0}', space=sflag, size = 0x4, scoped, tag = 'scoped memory for tpu_custom_call.1']
    #allocation7 [shape = 'u8[16384]{0}', space=vmem, size = 0x4000, scoped, tag = 'input window, operand 2, single buffered']
    #allocation8 [shape = 'u8[8192]{0}', space=vmem, size = 0x2000, scoped, tag = 'output window, operand 0']
    %8 = vsyncpa [#allocation3], 0
    %s9 = scalar_lea.sflag [#allocation3], 1
    %10 = vsyncpa %s9, 0
    %11 = vsyncpa [#allocation6], 0
    %12 = vsyncpa [#allocation4], 0
    %s13 = scalar_lea.sflag [#allocation4], 1
    %14 = vsyncpa %s13, 0
    loop: start=0, step=1, limit=4
    $region2: #{tpu_custom_call.1} parent=1 // loop_pre_header
      _
    $region3: #{tpu_custom_call.1} parent=1 // loop_header
      %s16 = sphi 0, %s20
      %p17 = scmp.ge.s32.totalorder %s16, 4
      %s26 = sphi 0, %s28
      %s29 = sphi 0, %s26
      %s30 = sphi 0, %s29
      %s46 = sphi 0, %s30
      %s50 = sphi 0, %s50
      %s52 = sphi 0, %s50
      %s53 = sphi 0, %s52
      %s67 = sphi 0, %s53
      %s71 = sphi 0, %s71
      %s73 = sphi 0, %s71
      %s74 = sphi 0, %s73
      %s88 = sphi 0, %s74
      %s94 = sphi 0, %s96
      %s97 = sphi 0, %s94
      %s98 = sphi 0, %s97
      %s114 = sphi 0, %s98
    $region4: #{tpu_custom_call.1} parent=1 // loop_header_branch
      %19 = sbr.rel (%p17) target = $region8
    $region5: #{tpu_custom_call.1} parent=1 // loop_body
      %s21 = ssub.s32 %s16, 1
      %s22 = ssub.s32 %s16, 2
      %s23 = sadd.s32 %s16, 1
      %s24 = ssub.s32 %s16, %s23
      %p25 = scmp.eq.s32.totalorder %s24, 0
      %s27 = sadd.s32 %s26, 1
      %s28 = scalar_select %p25, %s26, %s27
      %p31 = pneg %p25
      %p32 = scmp.eq.s32.totalorder %s16, 1
      %p33 = por %p31, %p32
      %p34 = scmp.ne.s32.totalorder %s26, %s29
      %p35 = scmp.eq.s32.totalorder %s16, 0
      %p36 = por %p34, %p35
      %p37 = scmp.ne.s32.totalorder %s26, %s29
      %p38 = scmp.eq.s32.totalorder %s21, 1
      %p39 = por %p37, %p38
      %p40 = scmp.ne.s32.totalorder %s29, %s30
      %p41 = scmp.eq.s32.totalorder %s21, 0
      %p42 = por %p40, %p41
      %p43 = scmp.ne.s32.totalorder %s29, %s30
      %p44 = scmp.eq.s32.totalorder %s22, 1
      %p45 = por %p43, %p44
      %p47 = scmp.ne.s32.totalorder %s30, %s46
      %p48 = scmp.eq.s32.totalorder %s22, 0
      %p49 = por %p47, %p48
      %s51 = sadd.s32 %s50, 1
      %p54 = scmp.eq.s32.totalorder %s16, 1
      %p55 = scmp.ne.s32.totalorder %s50, %s52
      %p56 = scmp.eq.s32.totalorder %s16, 0
      %p57 = por %p55, %p56
      %p58 = scmp.ne.s32.totalorder %s50, %s52
      %p59 = scmp.eq.s32.totalorder %s21, 1
      %p60 = por %p58, %p59
      %p61 = scmp.ne.s32.totalorder %s52, %s53
      %p62 = scmp.eq.s32.totalorder %s21, 0
      %p63 = por %p61, %p62
      %p64 = scmp.ne.s32.totalorder %s52, %s53
      %p65 = scmp.eq.s32.totalorder %s22, 1
      %p66 = por %p64, %p65
      %p68 = scmp.ne.s32.totalorder %s53, %s67
      %p69 = scmp.eq.s32.totalorder %s22, 0
      %p70 = por %p68, %p69
      %s72 = sadd.s32 %s71, 1
      %p75 = scmp.eq.s32.totalorder %s16, 1
      %p76 = scmp.ne.s32.totalorder %s71, %s73
      %p77 = scmp.eq.s32.totalorder %s16, 0
      %p78 = por %p76, %p77
      %p79 = scmp.ne.s32.totalorder %s71, %s73
      %p80 = scmp.eq.s32.totalorder %s21, 1
      %p81 = por %p79, %p80
      %p82 = scmp.ne.s32.totalorder %s73, %s74
      %p83 = scmp.eq.s32.totalorder %s21, 0
      %p84 = por %p82, %p83
      %p85 = scmp.ne.s32.totalorder %s73, %s74
      %p86 = scmp.eq.s32.totalorder %s22, 1
      %p87 = por %p85, %p86
      %p89 = scmp.ne.s32.totalorder %s74, %s88
      %p90 = scmp.eq.s32.totalorder %s22, 0
      %p91 = por %p89, %p90
      %s92 = ssub.s32 %s16, %s23
      %p93 = scmp.eq.s32.totalorder %s92, 0
      %s95 = sadd.s32 %s94, 1
      %s96 = scalar_select %p93, %s94, %s95
      %p99 = pneg %p93
      %p100 = scmp.eq.s32.totalorder %s16, 1
      %p101 = por %p99, %p100
      %p102 = scmp.ne.s32.totalorder %s94, %s97
      %p103 = scmp.eq.s32.totalorder %s16, 0
      %p104 = por %p102, %p103
      %p105 = scmp.ne.s32.totalorder %s94, %s97
      %p106 = scmp.eq.s32.totalorder %s21, 1
      %p107 = por %p105, %p106
      %p108 = scmp.ne.s32.totalorder %s97, %s98
      %p109 = scmp.eq.s32.totalorder %s21, 0
      %p110 = por %p108, %p109
      %p111 = scmp.ne.s32.totalorder %s97, %s98
      %p112 = scmp.eq.s32.totalorder %s22, 1
      %p113 = por %p111, %p112
      %p115 = scmp.ne.s32.totalorder %s98, %s114
      %p116 = scmp.eq.s32.totalorder %s22, 0
      %p117 = por %p115, %p116
      %p118 = scmp.le.s32.totalorder 1, %s16
      %p119 = scmp.lt.s32.totalorder %s16, 3
      %p120 = pnand %p118, %p119
      %p121 = pneg %p120
      // Predicated region
      $region9: #{tpu_custom_call.1} parent=5 // pred_check
        _
      $region10: #{tpu_custom_call.1} parent=5 // pred_check_branch
        %123 = sbr.rel (%p120) target = $region12
      $region11: #{tpu_custom_call.1} parent=5 // pred_region
        %s124 = ssub.s32 %s16, 1
        // Predicated region
        $region13: #{tpu_custom_call.1} parent=11 // pred_check
          %p125 = pneg %p63
        $region14: #{tpu_custom_call.1} parent=11 // pred_check_branch
          %127 = sbr.rel (%p125) target = $region16
        $region15: #{tpu_custom_call.1} parent=11 // pred_region
          %s129 = ssub.s32 128, 128
          %130 = vsyncadd [#allocation6], %s129
          %s132 = sshll.u32 [#allocation5], 4
          %s133 = int_to_ptr.vmem [resolvable:$true] %s132
          %135 = dma.hbm_to_vmem [thread:$0]  %s1, 128, %s133, [#allocation6]
        $region16: #{tpu_custom_call.1} parent=11 // pred_fallthru
          _
        // Predicated region
        $region17: #{tpu_custom_call.1} parent=11 // pred_check
          %p136 = pneg %p84
        $region18: #{tpu_custom_call.1} parent=11 // pred_check_branch
          %138 = sbr.rel (%p136) target = $region20
        $region19: #{tpu_custom_call.1} parent=11 // pred_region
          %s140 = ssub.s32 512, 512
          %141 = vsyncadd [#allocation6], %s140
          %s142 = sshll.u32 [#allocation7], 4
          %s143 = int_to_ptr.vmem [resolvable:$true] %s142
          %148 = dma.hbm_to_vmem [thread:$0]  %s2, 512, %s143, [#allocation6], 128, 128, 8
        $region20: #{tpu_custom_call.1} parent=11 // pred_fallthru
          _
      $region12: #{tpu_custom_call.1} parent=5 // pred_fallthru
        _
      %p149 = scmp.lt.s32.totalorder %s16, 2
      // Predicated region
      $region21: #{tpu_custom_call.1} parent=5 // pred_check
        %p150 = pneg %p149
      $region22: #{tpu_custom_call.1} parent=5 // pred_check_branch
        %152 = sbr.rel (%p150) target = $region24
      $region23: #{tpu_custom_call.1} parent=5 // pred_region
        // Predicated region
        $region25: #{tpu_custom_call.1} parent=23 // pred_check
          %p153 = pneg %p36
        $region26: #{tpu_custom_call.1} parent=23 // pred_check_branch
          %155 = sbr.rel (%p153) target = $region28
        $region27: #{tpu_custom_call.1} parent=23 // pred_region
          %s156 = sand.u32 %s26, 1
          %s157 = scalar_lea.sflag [#allocation3], %s156
          %s158 = sand.u32 %s26, 1
          %s159 = smul.addr %s158, 128
          %s160 = scalar_lea.vmem [#allocation2], %s159
          %s161 = smul.u32 8, %s16
          %s163 = ssub.s32 2048, 2048
          %164 = vsyncadd %s157, %s163
          %s165 = smul.addr %s161, 2
          %s166 = smul.addr %s165, 128
          %s167 = scalar_lea.hbm %s0, %s166
          %s168 = sshll.u32 %s160, 4
          %s169 = int_to_ptr.vmem [resolvable:$true] %s168
          %174 = dma.hbm_to_vmem [thread:$0]  %s167, 2048, %s169, %s157, 128, 128, 8
        $region28: #{tpu_custom_call.1} parent=23 // pred_fallthru
          _
      $region24: #{tpu_custom_call.1} parent=5 // pred_fallthru
        _
      %p175 = scmp.le.s32.totalorder 1, %s16
      %p176 = scmp.lt.s32.totalorder %s16, 3
      %p177 = pnand %p175, %p176
      %p178 = pneg %p177
      // Predicated region
      $region29: #{tpu_custom_call.1} parent=5 // pred_check
        _
      $region30: #{tpu_custom_call.1} parent=5 // pred_check_branch
        %180 = sbr.rel (%p177) target = $region32
      $region31: #{tpu_custom_call.1} parent=5 // pred_region
        %s181 = ssub.s32 %s16, 1
        %s182 = sand.u32 %s29, 1
        %s183 = scalar_lea.sflag [#allocation3], %s182
        %s184 = sand.u32 %s29, 1
        %s185 = smul.addr %s184, 128
        %s186 = scalar_lea.vmem [#allocation2], %s185
        // Predicated region
        $region33: #{tpu_custom_call.1} parent=31 // pred_check
          %p187 = pneg %p42
        $region34: #{tpu_custom_call.1} parent=31 // pred_check_branch
          %189 = sbr.rel (%p187) target = $region36
        $region35: #{tpu_custom_call.1} parent=31 // pred_region
          %190 = dma.done %s183, 2048
        $region36: #{tpu_custom_call.1} parent=31 // pred_fallthru
          _
        // Predicated region
        $region37: #{tpu_custom_call.1} parent=31 // pred_check
          %p191 = pneg %p63
        $region38: #{tpu_custom_call.1} parent=31 // pred_check_branch
          %193 = sbr.rel (%p191) target = $region40
        $region39: #{tpu_custom_call.1} parent=31 // pred_region
          %194 = dma.done [#allocation6], 128
        $region40: #{tpu_custom_call.1} parent=31 // pred_fallthru
          _
        // Predicated region
        $region41: #{tpu_custom_call.1} parent=31 // pred_check
          %p195 = pneg %p84
        $region42: #{tpu_custom_call.1} parent=31 // pred_check_branch
          %197 = sbr.rel (%p195) target = $region44
        $region43: #{tpu_custom_call.1} parent=31 // pred_region
          %198 = dma.done [#allocation6], 512
        $region44: #{tpu_custom_call.1} parent=31 // pred_fallthru
          _
        %s199 = sand.u32 %s29, 1
        %s200 = scalar_lea.sflag [#allocation3], %s199
        %s201 = sand.u32 %s29, 1
        %s202 = smul.addr %s201, 128
        %s203 = scalar_lea.vmem [#allocation2], %s202
        %p204 = pneg %p42
        %p205 = pneg %p39
        %p206 = pneg %p63
        %p207 = pneg %p60
        %p208 = pneg %p84
        %p209 = pneg %p81
        %p210 = pneg %p110
        %p211 = pneg %p107
        %s212 = sand.u32 %s97, 1
        %s213 = scalar_lea.sflag [#allocation4], %s212
        %s214 = sand.u32 %s97, 1
        %s215 = smul.addr %s214, 8
        %s216 = scalar_lea.vmem [#allocation8], %s215
        %s217 = smul.u32 8, %s21
        %v218 = vld [vmem:[#allocation5] sm:$0x1]
        %v219 = vld [vmem:[#allocation5 + $0x1] sm:$0x1]
        %v220 = vld [vmem:[#allocation5 + $0x2] sm:$0x1]
        %v221 = vld [vmem:[#allocation5 + $0x3] sm:$0x1]
        %v222 = vld [vmem:[%s186] sm:$0xff]
        %v223 = vld [vmem:[%s186 + $0x8] sm:$0xff]
        %v224 = vld [vmem:[%s186 + $0x10] sm:$0xff]
        %v225 = vld [vmem:[%s186 + $0x18] sm:$0xff]
        %v226 = vld [vmem:[%s186 + $0x20] sm:$0xff]
        %v227 = vld [vmem:[%s186 + $0x28] sm:$0xff]
        %v228 = vld [vmem:[%s186 + $0x30] sm:$0xff]
        %v229 = vld [vmem:[%s186 + $0x38] sm:$0xff]
        %v230 = vld [vmem:[%s186 + $0x40] sm:$0xff]
        %v231 = vld [vmem:[%s186 + $0x48] sm:$0xff]
        %v232 = vld [vmem:[%s186 + $0x50] sm:$0xff]
        %v233 = vld [vmem:[%s186 + $0x58] sm:$0xff]
        %v234 = vld [vmem:[%s186 + $0x60] sm:$0xff]
        %v235 = vld [vmem:[%s186 + $0x68] sm:$0xff]
        %v236 = vld [vmem:[%s186 + $0x70] sm:$0xff]
        %v237 = vld [vmem:[%s186 + $0x78] sm:$0xff]
        %v238 = vlaneseq
        %v239 = vshrl.u32 %v238, 7
        %v240 = vsub.s32 0, %v239
        %v241 = vrot.slane %v218, %v240
        %v242 = vmul.f32 %v222, %v241
        %v243 = vmul.f32 %v223, %v241
        %v244 = vmul.f32 %v224, %v241
        %v245 = vmul.f32 %v225, %v241
        %v246 = vmul.f32 %v226, %v241
        %v247 = vmul.f32 %v227, %v241
        %v248 = vmul.f32 %v228, %v241
        %v249 = vmul.f32 %v229, %v241
        %v250 = vmul.f32 %v230, %v241
        %v251 = vmul.f32 %v231, %v241
        %v252 = vmul.f32 %v232, %v241
        %v253 = vmul.f32 %v233, %v241
        %v254 = vmul.f32 %v234, %v241
        %v255 = vmul.f32 %v235, %v241
        %v256 = vmul.f32 %v236, %v241
        %v257 = vmul.f32 %v237, %v241
        %vm258 = vcmask 261120
        %v259 = vsel %vm258, %v242, 0.0
        %260 = vadd.xlane.f32.xlu0 %v259
        %v261 = vpop.xlane.xlu0 %260
        %v262 = vsel %vm258, %v243, 0.0
        %263 = vadd.xlane.f32.xlu0 %v262
        %v264 = vpop.xlane.xlu0 %263
        %v265 = vsel %vm258, %v244, 0.0
        %266 = vadd.xlane.f32.xlu0 %v265
        %v267 = vpop.xlane.xlu0 %266
        %v268 = vsel %vm258, %v245, 0.0
        %269 = vadd.xlane.f32.xlu0 %v268
        %v270 = vpop.xlane.xlu0 %269
        %v271 = vsel %vm258, %v246, 0.0
        %272 = vadd.xlane.f32.xlu0 %v271
        %v273 = vpop.xlane.xlu0 %272
        %v274 = vsel %vm258, %v247, 0.0
        %275 = vadd.xlane.f32.xlu0 %v274
        %v276 = vpop.xlane.xlu0 %275
        %v277 = vsel %vm258, %v248, 0.0
        %278 = vadd.xlane.f32.xlu0 %v277
        %v279 = vpop.xlane.xlu0 %278
        %v280 = vsel %vm258, %v249, 0.0
        %281 = vadd.xlane.f32.xlu0 %v280
        %v282 = vpop.xlane.xlu0 %281
        %v283 = vsel %vm258, %v250, 0.0
        %284 = vadd.xlane.f32.xlu0 %v283
        %v285 = vpop.xlane.xlu0 %284
        %v286 = vsel %vm258, %v251, 0.0
        %287 = vadd.xlane.f32.xlu0 %v286
        %v288 = vpop.xlane.xlu0 %287
        %v289 = vsel %vm258, %v252, 0.0
        %290 = vadd.xlane.f32.xlu0 %v289
        %v291 = vpop.xlane.xlu0 %290
        %v292 = vsel %vm258, %v253, 0.0
        %293 = vadd.xlane.f32.xlu0 %v292
        %v294 = vpop.xlane.xlu0 %293
        %v295 = vsel %vm258, %v254, 0.0
        %296 = vadd.xlane.f32.xlu0 %v295
        %v297 = vpop.xlane.xlu0 %296
        %v298 = vsel %vm258, %v255, 0.0
        %299 = vadd.xlane.f32.xlu0 %v298
        %v300 = vpop.xlane.xlu0 %299
        %v301 = vsel %vm258, %v256, 0.0
        %302 = vadd.xlane.f32.xlu0 %v301
        %v303 = vpop.xlane.xlu0 %302
        %v304 = vsel %vm258, %v257, 0.0
        %305 = vadd.xlane.f32.xlu0 %v304
        %v306 = vpop.xlane.xlu0 %305
        %v307 = vmax.f32 %v261, %v264
        %v308 = vrot.slane %v307, 4
        %v309 = vmax.f32 %v307, %v308
        %v310 = vrot.slane %v309, 2
        %v311 = vmax.f32 %v309, %v310
        %v312 = vrot.slane %v311, 1
        %v313 = vmax.f32 %v311, %v312
        %v314 = vmax.f32 %v267, %v270
        %v315 = vrot.slane %v314, 4
        %v316 = vmax.f32 %v314, %v315
        %v317 = vrot.slane %v316, 2
        %v318 = vmax.f32 %v316, %v317
        %v319 = vrot.slane %v318, 1
        %v320 = vmax.f32 %v318, %v319
        %v321 = vmax.f32 %v273, %v276
        %v322 = vrot.slane %v321, 4
        %v323 = vmax.f32 %v321, %v322
        %v324 = vrot.slane %v323, 2
        %v325 = vmax.f32 %v323, %v324
        %v326 = vrot.slane %v325, 1
        %v327 = vmax.f32 %v325, %v326
        %v328 = vmax.f32 %v279, %v282
        %v329 = vrot.slane %v328, 4
        %v330 = vmax.f32 %v328, %v329
        %v331 = vrot.slane %v330, 2
        %v332 = vmax.f32 %v330, %v331
        %v333 = vrot.slane %v332, 1
        %v334 = vmax.f32 %v332, %v333
        %v335 = vmax.f32 %v285, %v288
        %v336 = vrot.slane %v335, 4
        %v337 = vmax.f32 %v335, %v336
        %v338 = vrot.slane %v337, 2
        %v339 = vmax.f32 %v337, %v338
        %v340 = vrot.slane %v339, 1
        %v341 = vmax.f32 %v339, %v340
        %v342 = vmax.f32 %v291, %v294
        %v343 = vrot.slane %v342, 4
        %v344 = vmax.f32 %v342, %v343
        %v345 = vrot.slane %v344, 2
        %v346 = vmax.f32 %v344, %v345
        %v347 = vrot.slane %v346, 1
        %v348 = vmax.f32 %v346, %v347
        %v349 = vmax.f32 %v297, %v300
        %v350 = vrot.slane %v349, 4
        %v351 = vmax.f32 %v349, %v350
        %v352 = vrot.slane %v351, 2
        %v353 = vmax.f32 %v351, %v352
        %v354 = vrot.slane %v353, 1
        %v355 = vmax.f32 %v353, %v354
        %v356 = vmax.f32 %v303, %v306
        %v357 = vrot.slane %v356, 4
        %v358 = vmax.f32 %v356, %v357
        %v359 = vrot.slane %v358, 2
        %v360 = vmax.f32 %v358, %v359
        %v361 = vrot.slane %v360, 1
        %v362 = vmax.f32 %v360, %v361
        %v363 = vsub.f32 %v261, %v313
        %v364 = vsub.f32 %v264, %v313
        %v365 = vsub.f32 %v267, %v320
        %v366 = vsub.f32 %v270, %v320
        %v367 = vsub.f32 %v273, %v327
        %v368 = vsub.f32 %v276, %v327
        %v369 = vsub.f32 %v279, %v334
        %v370 = vsub.f32 %v282, %v334
        %v371 = vsub.f32 %v285, %v341
        %v372 = vsub.f32 %v288, %v341
        %v373 = vsub.f32 %v291, %v348
        %v374 = vsub.f32 %v294, %v348
        %v375 = vsub.f32 %v297, %v355
        %v376 = vsub.f32 %v300, %v355
        %v377 = vsub.f32 %v303, %v362
        %v378 = vsub.f32 %v306, %v362
        %v379 = vmul.f32 %v363, 1.442695
        %v380 = vpow.pop %v379
        %v381 = vmul.f32 %v364, 1.442695
        %v382 = vpow.pop %v381
        %v383 = vmul.f32 %v365, 1.442695
        %v384 = vpow.pop %v383
        %v385 = vmul.f32 %v366, 1.442695
        %v386 = vpow.pop %v385
        %v387 = vmul.f32 %v367, 1.442695
        %v388 = vpow.pop %v387
        %v389 = vmul.f32 %v368, 1.442695
        %v390 = vpow.pop %v389
        %v391 = vmul.f32 %v369, 1.442695
        %v392 = vpow.pop %v391
        %v393 = vmul.f32 %v370, 1.442695
        %v394 = vpow.pop %v393
        %v395 = vmul.f32 %v371, 1.442695
        %v396 = vpow.pop %v395
        %v397 = vmul.f32 %v372, 1.442695
        %v398 = vpow.pop %v397
        %v399 = vmul.f32 %v373, 1.442695
        %v400 = vpow.pop %v399
        %v401 = vmul.f32 %v374, 1.442695
        %v402 = vpow.pop %v401
        %v403 = vmul.f32 %v375, 1.442695
        %v404 = vpow.pop %v403
        %v405 = vmul.f32 %v376, 1.442695
        %v406 = vpow.pop %v405
        %v407 = vmul.f32 %v377, 1.442695
        %v408 = vpow.pop %v407
        %v409 = vmul.f32 %v378, 1.442695
        %v410 = vpow.pop %v409
        %v411 = vadd.f32 %v380, %v382
        %v412 = vrot.slane %v411, 4
        %v413 = vadd.f32 %v411, %v412
        %v414 = vrot.slane %v413, 2
        %v415 = vadd.f32 %v413, %v414
        %v416 = vrot.slane %v415, 1
        %v417 = vadd.f32 %v415, %v416
        %v418 = vadd.f32 %v384, %v386
        %v419 = vrot.slane %v418, 4
        %v420 = vadd.f32 %v418, %v419
        %v421 = vrot.slane %v420, 2
        %v422 = vadd.f32 %v420, %v421
        %v423 = vrot.slane %v422, 1
        %v424 = vadd.f32 %v422, %v423
        %v425 = vadd.f32 %v388, %v390
        %v426 = vrot.slane %v425, 4
        %v427 = vadd.f32 %v425, %v426
        %v428 = vrot.slane %v427, 2
        %v429 = vadd.f32 %v427, %v428
        %v430 = vrot.slane %v429, 1
        %v431 = vadd.f32 %v429, %v430
        %v432 = vadd.f32 %v392, %v394
        %v433 = vrot.slane %v432, 4
        %v434 = vadd.f32 %v432, %v433
        %v435 = vrot.slane %v434, 2
        %v436 = vadd.f32 %v434, %v435
        %v437 = vrot.slane %v436, 1
        %v438 = vadd.f32 %v436, %v437
        %v439 = vadd.f32 %v396, %v398
        %v440 = vrot.slane %v439, 4
        %v441 = vadd.f32 %v439, %v440
        %v442 = vrot.slane %v441, 2
        %v443 = vadd.f32 %v441, %v442
        %v444 = vrot.slane %v443, 1
        %v445 = vadd.f32 %v443, %v444
        %v446 = vadd.f32 %v400, %v402
        %v447 = vrot.slane %v446, 4
        %v448 = vadd.f32 %v446, %v447
        %v449 = vrot.slane %v448, 2
        %v450 = vadd.f32 %v448, %v449
        %v451 = vrot.slane %v450, 1
        %v452 = vadd.f32 %v450, %v451
        %v453 = vadd.f32 %v404, %v406
        %v454 = vrot.slane %v453, 4
        %v455 = vadd.f32 %v453, %v454
        %v456 = vrot.slane %v455, 2
        %v457 = vadd.f32 %v455, %v456
        %v458 = vrot.slane %v457, 1
        %v459 = vadd.f32 %v457, %v458
        %v460 = vadd.f32 %v408, %v410
        %v461 = vrot.slane %v460, 4
        %v462 = vadd.f32 %v460, %v461
        %v463 = vrot.slane %v462, 2
        %v464 = vadd.f32 %v462, %v463
        %v465 = vrot.slane %v464, 1
        %v466 = vadd.f32 %v464, %v465
        %v467 = vrcp.pop %v417
        %v468 = vrcp.pop %v424
        %v469 = vrcp.pop %v431
        %v470 = vrcp.pop %v438
        %v471 = vrcp.pop %v445
        %v472 = vrcp.pop %v452
        %v473 = vrcp.pop %v459
        %v474 = vrcp.pop %v466
        %v475 = vmul.f32 %v380, %v467
        %v476 = vmul.f32 %v382, %v467
        %v477 = vmul.f32 %v384, %v468
        %v478 = vmul.f32 %v386, %v468
        %v479 = vmul.f32 %v388, %v469
        %v480 = vmul.f32 %v390, %v469
        %v481 = vmul.f32 %v392, %v470
        %v482 = vmul.f32 %v394, %v470
        %v483 = vmul.f32 %v396, %v471
        %v484 = vmul.f32 %v398, %v471
        %v485 = vmul.f32 %v400, %v472
        %v486 = vmul.f32 %v402, %v472
        %v487 = vmul.f32 %v404, %v473
        %v488 = vmul.f32 %v406, %v473
        %v489 = vmul.f32 %v408, %v474
        %v490 = vmul.f32 %v410, %v474
        %v491 = vmul.f32 %v475, %v222
        %v492 = vmul.f32 %v476, %v223
        %v493 = vmul.f32 %v477, %v224
        %v494 = vmul.f32 %v478, %v225
        %v495 = vmul.f32 %v479, %v226
        %v496 = vmul.f32 %v480, %v227
        %v497 = vmul.f32 %v481, %v228
        %v498 = vmul.f32 %v482, %v229
        %v499 = vmul.f32 %v483, %v230
        %v500 = vmul.f32 %v484, %v231
        %v501 = vmul.f32 %v485, %v232
        %v502 = vmul.f32 %v486, %v233
        %v503 = vmul.f32 %v487, %v234
        %v504 = vmul.f32 %v488, %v235
        %v505 = vmul.f32 %v489, %v236
        %v506 = vmul.f32 %v490, %v237
        %v507 = vsel %vm258, %v491, 0.0
        %v508 = vsel %vm258, %v492, 0.0
        %v509 = vadd.f32 %v507, %v508
        %v510 = vrot.slane %v509, 4
        %v511 = vadd.f32 %v509, %v510
        %v512 = vrot.slane %v511, 2
        %v513 = vadd.f32 %v511, %v512
        %v514 = vrot.slane %v513, 1
        %v515 = vadd.f32 %v513, %v514
        %v516 = vsel %vm258, %v493, 0.0
        %v517 = vsel %vm258, %v494, 0.0
        %v518 = vadd.f32 %v516, %v517
        %v519 = vrot.slane %v518, 4
        %v520 = vadd.f32 %v518, %v519
        %v521 = vrot.slane %v520, 2
        %v522 = vadd.f32 %v520, %v521
        %v523 = vrot.slane %v522, 1
        %v524 = vadd.f32 %v522, %v523
        %v525 = vsel %vm258, %v495, 0.0
        %v526 = vsel %vm258, %v496, 0.0
        %v527 = vadd.f32 %v525, %v526
        %v528 = vrot.slane %v527, 4
        %v529 = vadd.f32 %v527, %v528
        %v530 = vrot.slane %v529, 2
        %v531 = vadd.f32 %v529, %v530
        %v532 = vrot.slane %v531, 1
        %v533 = vadd.f32 %v531, %v532
        %v534 = vsel %vm258, %v497, 0.0
        %v535 = vsel %vm258, %v498, 0.0
        %v536 = vadd.f32 %v534, %v535
        %v537 = vrot.slane %v536, 4
        %v538 = vadd.f32 %v536, %v537
        %v539 = vrot.slane %v538, 2
        %v540 = vadd.f32 %v538, %v539
        %v541 = vrot.slane %v540, 1
        %v542 = vadd.f32 %v540, %v541
        %v543 = vsel %vm258, %v499, 0.0
        %v544 = vsel %vm258, %v500, 0.0
        %v545 = vadd.f32 %v543, %v544
        %v546 = vrot.slane %v545, 4
        %v547 = vadd.f32 %v545, %v546
        %v548 = vrot.slane %v547, 2
        %v549 = vadd.f32 %v547, %v548
        %v550 = vrot.slane %v549, 1
        %v551 = vadd.f32 %v549, %v550
        %v552 = vsel %vm258, %v501, 0.0
        %v553 = vsel %vm258, %v502, 0.0
        %v554 = vadd.f32 %v552, %v553
        %v555 = vrot.slane %v554, 4
        %v556 = vadd.f32 %v554, %v555
        %v557 = vrot.slane %v556, 2
        %v558 = vadd.f32 %v556, %v557
        %v559 = vrot.slane %v558, 1
        %v560 = vadd.f32 %v558, %v559
        %v561 = vsel %vm258, %v503, 0.0
        %v562 = vsel %vm258, %v504, 0.0
        %v563 = vadd.f32 %v561, %v562
        %v564 = vrot.slane %v563, 4
        %v565 = vadd.f32 %v563, %v564
        %v566 = vrot.slane %v565, 2
        %v567 = vadd.f32 %v565, %v566
        %v568 = vrot.slane %v567, 1
        %v569 = vadd.f32 %v567, %v568
        %v570 = vsel %vm258, %v505, 0.0
        %v571 = vsel %vm258, %v506, 0.0
        %v572 = vadd.f32 %v570, %v571
        %v573 = vrot.slane %v572, 4
        %v574 = vadd.f32 %v572, %v573
        %v575 = vrot.slane %v574, 2
        %v576 = vadd.f32 %v574, %v575
        %v577 = vrot.slane %v576, 1
        %v578 = vadd.f32 %v576, %v577
        %v579 = vsel %vm258, %v222, 0.0
        %v580 = vsel %vm258, %v223, 0.0
        %v581 = vadd.f32 %v579, %v580
        %v582 = vrot.slane %v581, 4
        %v583 = vadd.f32 %v581, %v582
        %v584 = vrot.slane %v583, 2
        %v585 = vadd.f32 %v583, %v584
        %v586 = vrot.slane %v585, 1
        %v587 = vadd.f32 %v585, %v586
        %v588 = vsel %vm258, %v224, 0.0
        %v589 = vsel %vm258, %v225, 0.0
        %v590 = vadd.f32 %v588, %v589
        %v591 = vrot.slane %v590, 4
        %v592 = vadd.f32 %v590, %v591
        %v593 = vrot.slane %v592, 2
        %v594 = vadd.f32 %v592, %v593
        %v595 = vrot.slane %v594, 1
        %v596 = vadd.f32 %v594, %v595
        %v597 = vsel %vm258, %v226, 0.0
        %v598 = vsel %vm258, %v227, 0.0
        %v599 = vadd.f32 %v597, %v598
        %v600 = vrot.slane %v599, 4
        %v601 = vadd.f32 %v599, %v600
        %v602 = vrot.slane %v601, 2
        %v603 = vadd.f32 %v601, %v602
        %v604 = vrot.slane %v603, 1
        %v605 = vadd.f32 %v603, %v604
        %v606 = vsel %vm258, %v228, 0.0
        %v607 = vsel %vm258, %v229, 0.0
        %v608 = vadd.f32 %v606, %v607
        %v609 = vrot.slane %v608, 4
        %v610 = vadd.f32 %v608, %v609
        %v611 = vrot.slane %v610, 2
        %v612 = vadd.f32 %v610, %v611
        %v613 = vrot.slane %v612, 1
        %v614 = vadd.f32 %v612, %v613
        %v615 = vsel %vm258, %v230, 0.0
        %v616 = vsel %vm258, %v231, 0.0
        %v617 = vadd.f32 %v615, %v616
        %v618 = vrot.slane %v617, 4
        %v619 = vadd.f32 %v617, %v618
        %v620 = vrot.slane %v619, 2
        %v621 = vadd.f32 %v619, %v620
        %v622 = vrot.slane %v621, 1
        %v623 = vadd.f32 %v621, %v622
        %v624 = vsel %vm258, %v232, 0.0
        %v625 = vsel %vm258, %v233, 0.0
        %v626 = vadd.f32 %v624, %v625
        %v627 = vrot.slane %v626, 4
        %v628 = vadd.f32 %v626, %v627
        %v629 = vrot.slane %v628, 2
        %v630 = vadd.f32 %v628, %v629
        %v631 = vrot.slane %v630, 1
        %v632 = vadd.f32 %v630, %v631
        %v633 = vsel %vm258, %v234, 0.0
        %v634 = vsel %vm258, %v235, 0.0
        %v635 = vadd.f32 %v633, %v634
        %v636 = vrot.slane %v635, 4
        %v637 = vadd.f32 %v635, %v636
        %v638 = vrot.slane %v637, 2
        %v639 = vadd.f32 %v637, %v638
        %v640 = vrot.slane %v639, 1
        %v641 = vadd.f32 %v639, %v640
        %v642 = vsel %vm258, %v236, 0.0
        %v643 = vsel %vm258, %v237, 0.0
        %v644 = vadd.f32 %v642, %v643
        %v645 = vrot.slane %v644, 4
        %v646 = vadd.f32 %v644, %v645
        %v647 = vrot.slane %v646, 2
        %v648 = vadd.f32 %v646, %v647
        %v649 = vrot.slane %v648, 1
        %v650 = vadd.f32 %v648, %v649
        %v651 = vrcp.pop 16.0
        %v652 = vmul.f32 %v587, %v651
        %v653 = vmul.f32 %v596, %v651
        %v654 = vmul.f32 %v605, %v651
        %v655 = vmul.f32 %v614, %v651
        %v656 = vmul.f32 %v623, %v651
        %v657 = vmul.f32 %v632, %v651
        %v658 = vmul.f32 %v641, %v651
        %v659 = vmul.f32 %v650, %v651
        %v660 = vld [vmem:[#allocation7] sm:$0xff]
        %v661 = vld [vmem:[#allocation7 + $0x8] sm:$0xff]
        %v662 = vld [vmem:[#allocation7 + $0x10] sm:$0xff]
        %v663 = vld [vmem:[#allocation7 + $0x18] sm:$0xff]
        %v664 = vlaneseq
        %v665 = vshrl.u32 %v664, 7
        %v666 = vsub.s32 0, %v665
        %v667 = vrot.slane %v219, %v666
        %vm676 = vcmask 1041409
        %v677 = vsel %vm676, %v524, %v515
        %vm678 = vcmask 1042434
        %v679 = vsel %vm678, %v533, %v677
        %vm680 = vcmask 1043459
        %v681 = vsel %vm680, %v542, %v679
        %vm682 = vcmask 1044484
        %v683 = vsel %vm682, %v551, %v681
        %vm684 = vcmask 1045509
        %v685 = vsel %vm684, %v560, %v683
        %vm686 = vcmask 1046534
        %v687 = vsel %vm686, %v569, %v685
        %vm688 = vcmask 1047559
        %v689 = vsel %vm688, %v578, %v687
        %v690 = vsel %vm258, %v689, 0
        %692 = vmatprep.subr.mxu0 0.0
        %693 = vmatpush1.msra.mxu0 0.0
        %694 = vmatprep.subr.mxu0 0.0
        %695 = vmatpush1.msra.mxu0 0.0
        %696 = vmatprep.subr.mxu0 0.0
        %697 = vmatpush1.msra.mxu0 0.0
        %698 = vmatprep.subr.mxu0 0.0
        %699 = vmatpush1.msra.mxu0 0.0
        %700 = vmatprep.subr.mxu0 0.0
        %701 = vmatpush1.msra.mxu0 0.0
        %702 = vmatprep.subr.mxu0 0.0
        %703 = vmatpush1.msra.mxu0 0.0
        %704 = vmatprep.subr.mxu0 0.0
        %705 = vmatpush1.msra.mxu0 0.0
        %706 = vmatprep.subr.mxu0 0.0
        %707 = vmatpush1.msra.mxu0 0.0
        %708 = vmatprep.subr.mxu0 0.0
        %709 = vmatpush1.msra.mxu0 0.0
        %710 = vmatprep.subr.mxu0 0.0
        %711 = vmatpush1.msra.mxu0 0.0
        %712 = vmatprep.subr.mxu0 0.0
        %713 = vmatpush1.msra.mxu0 0.0
        %714 = vmatprep.subr.mxu0 0.0
        %715 = vmatpush1.msra.mxu0 0.0
        %716 = vmatprep.subr.mxu0 0.0
        %717 = vmatpush1.msra.mxu0 %v663
        %718 = vmatprep.subr.mxu0 0.0
        %719 = vmatpush1.msra.mxu0 %v662
        %720 = vmatprep.subr.mxu0 0.0
        %721 = vmatpush1.msra.mxu0 %v661
        %722 = vmatprep.subr.mxu0 0.0
        %723 = vmatpush1.msra.mxu0 %v660
        %724 = vmatprep.subr.mxu0 0.0
        %725 = vmatpush2.msra.mxu0 0.0
        %726 = vmatprep.subr.mxu0 0.0
        %727 = vmatpush2.msra.mxu0 0.0
        %728 = vmatprep.subr.mxu0 0.0
        %729 = vmatpush2.msra.mxu0 0.0
        %730 = vmatprep.subr.mxu0 0.0
        %731 = vmatpush2.msra.mxu0 0.0
        %732 = vmatprep.subr.mxu0 0.0
        %733 = vmatpush2.msra.mxu0 0.0
        %734 = vmatprep.subr.mxu0 0.0
        %735 = vmatpush2.msra.mxu0 0.0
        %736 = vmatprep.subr.mxu0 0.0
        %737 = vmatpush2.msra.mxu0 0.0
        %738 = vmatprep.subr.mxu0 0.0
        %739 = vmatpush2.msra.mxu0 0.0
        %740 = vmatprep.subr.mxu0 0.0
        %741 = vmatpush2.msra.mxu0 0.0
        %742 = vmatprep.subr.mxu0 0.0
        %743 = vmatpush2.msra.mxu0 0.0
        %744 = vmatprep.subr.mxu0 0.0
        %745 = vmatpush2.msra.mxu0 0.0
        %746 = vmatprep.subr.mxu0 0.0
        %747 = vmatpush2.msra.mxu0 0.0
        %748 = vmatprep.subr.mxu0 0.0
        %749 = vmatpush2.msra.mxu0 0.0
        %750 = vmatprep.subr.mxu0 0.0
        %751 = vmatpush2.msra.mxu0 0.0
        %752 = vmatprep.subr.mxu0 0.0
        %753 = vmatpush2.msra.mxu0 0.0
        %754 = vmatprep.subr.mxu0 0.0
        %755 = vmatpush2.msra.mxu0 0.0
        %756 = vmatprep.mubr.f32.mxu0 0.0
        %757 = vmatmul.mubr.f32.gmra.mxu0 %v690
        %v758 = vpop.f32.mrf.mxu0
        %v759 = vadd.f32 %v667, %v758
        %v760 = vpop.f32.mrf.mxu0
        %761 = vdwg.mxu0
        %v763 = vrot.slane %v759, 1
        %v764 = vrot.slane %v759, 2
        %v765 = vrot.slane %v759, 3
        %v766 = vrot.slane %v759, 4
        %v767 = vrot.slane %v759, 5
        %v768 = vrot.slane %v759, 6
        %v769 = vrot.slane %v759, 7
        %v778 = vadd.f32 %v652, %v759
        %v779 = vadd.f32 %v653, %v763
        %v780 = vadd.f32 %v654, %v764
        %v781 = vadd.f32 %v655, %v765
        %v782 = vadd.f32 %v656, %v766
        %v783 = vadd.f32 %v657, %v767
        %v784 = vadd.f32 %v658, %v768
        %v785 = vadd.f32 %v659, %v769
        %v794 = vrot.slane %v779, 7
        %v795 = vsel %vm676, %v794, %v778
        %v796 = vrot.slane %v780, 6
        %v797 = vsel %vm678, %v796, %v795
        %v798 = vrot.slane %v781, 5
        %v799 = vsel %vm680, %v798, %v797
        %v800 = vrot.slane %v782, 4
        %v801 = vsel %vm682, %v800, %v799
        %v802 = vrot.slane %v783, 3
        %v803 = vsel %vm684, %v802, %v801
        %v804 = vrot.slane %v784, 2
        %v805 = vsel %vm686, %v804, %v803
        %v806 = vrot.slane %v785, 1
        %v807 = vsel %vm688, %v806, %v805
        %v809 = vsel %vm258, %v807, 0.0
        %810 = vadd.xlane.f32.xlu0 %v809
        %v811 = vpop.xlane.xlu0 %810
        %v812 = vrcp.pop 32.0
        %v813 = vmul.f32 %v811, %v812
        %v815 = vrot.slane %v813, 1
        %v816 = vrot.slane %v813, 2
        %v817 = vrot.slane %v813, 3
        %v818 = vrot.slane %v813, 4
        %v819 = vrot.slane %v813, 5
        %v820 = vrot.slane %v813, 6
        %v821 = vrot.slane %v813, 7
        %v830 = vsub.f32 %v778, %v813
        %v831 = vsub.f32 %v779, %v815
        %v832 = vsub.f32 %v780, %v816
        %v833 = vsub.f32 %v781, %v817
        %v834 = vsub.f32 %v782, %v818
        %v835 = vsub.f32 %v783, %v819
        %v836 = vsub.f32 %v784, %v820
        %v837 = vsub.f32 %v785, %v821
        %v838 = vmul.f32 %v830, %v830
        %v839 = vmul.f32 %v831, %v831
        %v840 = vmul.f32 %v832, %v832
        %v841 = vmul.f32 %v833, %v833
        %v842 = vmul.f32 %v834, %v834
        %v843 = vmul.f32 %v835, %v835
        %v844 = vmul.f32 %v836, %v836
        %v845 = vmul.f32 %v837, %v837
        %v854 = vrot.slane %v839, 7
        %v855 = vsel %vm676, %v854, %v838
        %v856 = vrot.slane %v840, 6
        %v857 = vsel %vm678, %v856, %v855
        %v858 = vrot.slane %v841, 5
        %v859 = vsel %vm680, %v858, %v857
        %v860 = vrot.slane %v842, 4
        %v861 = vsel %vm682, %v860, %v859
        %v862 = vrot.slane %v843, 3
        %v863 = vsel %vm684, %v862, %v861
        %v864 = vrot.slane %v844, 2
        %v865 = vsel %vm686, %v864, %v863
        %v866 = vrot.slane %v845, 1
        %v867 = vsel %vm688, %v866, %v865
        %v869 = vsel %vm258, %v867, 0.0
        %870 = vadd.xlane.f32.xlu0 %v869
        %v871 = vpop.xlane.xlu0 %870
        %v872 = vmul.f32 %v871, %v812
        %v873 = vadd.f32 %v872, 1e-05
        %v874 = vrsqrt.pop %v873
        %v876 = vrot.slane %v874, 1
        %v877 = vrot.slane %v874, 2
        %v878 = vrot.slane %v874, 3
        %v879 = vrot.slane %v874, 4
        %v880 = vrot.slane %v874, 5
        %v881 = vrot.slane %v874, 6
        %v882 = vrot.slane %v874, 7
        %v891 = vmul.f32 %v830, %v874
        %v892 = vmul.f32 %v831, %v876
        %v893 = vmul.f32 %v832, %v877
        %v894 = vmul.f32 %v833, %v878
        %v895 = vmul.f32 %v834, %v879
        %v896 = vmul.f32 %v835, %v880
        %v897 = vmul.f32 %v836, %v881
        %v898 = vmul.f32 %v837, %v882
        %v899 = vlaneseq
        %v900 = vshrl.u32 %v899, 7
        %v901 = vsub.s32 0, %v900
        %v902 = vrot.slane %v220, %v901
        %v903 = vmul.f32 %v891, %v902
        %v904 = vmul.f32 %v892, %v902
        %v905 = vmul.f32 %v893, %v902
        %v906 = vmul.f32 %v894, %v902
        %v907 = vmul.f32 %v895, %v902
        %v908 = vmul.f32 %v896, %v902
        %v909 = vmul.f32 %v897, %v902
        %v910 = vmul.f32 %v898, %v902
        %v911 = vlaneseq
        %v912 = vshrl.u32 %v911, 7
        %v913 = vsub.s32 0, %v912
        %v914 = vrot.slane %v221, %v913
        %v915 = vadd.f32 %v903, %v914
        %v916 = vadd.f32 %v904, %v914
        %v917 = vadd.f32 %v905, %v914
        %v918 = vadd.f32 %v906, %v914
        %v919 = vadd.f32 %v907, %v914
        %v920 = vadd.f32 %v908, %v914
        %v921 = vadd.f32 %v909, %v914
        %v922 = vadd.f32 %v910, %v914
        %v931 = vrot.slane %v916, 7
        %v932 = vsel %vm676, %v931, %v915
        %v933 = vrot.slane %v917, 6
        %v934 = vsel %vm678, %v933, %v932
        %v935 = vrot.slane %v918, 5
        %v936 = vsel %vm680, %v935, %v934
        %v937 = vrot.slane %v919, 4
        %v938 = vsel %vm682, %v937, %v936
        %v939 = vrot.slane %v920, 3
        %v940 = vsel %vm684, %v939, %v938
        %v941 = vrot.slane %v921, 2
        %v942 = vsel %vm686, %v941, %v940
        %v943 = vrot.slane %v922, 1
        %v944 = vsel %vm688, %v943, %v942
        %946 = vst.msk [vmem:[%s216] sm:$0xff] %vm258, %v944
        %s947 = sand.u32 %s97, 1
        %s948 = scalar_lea.sflag [#allocation4], %s947
        %s949 = sand.u32 %s97, 1
        %s950 = smul.addr %s949, 8
        %s951 = scalar_lea.vmem [#allocation8], %s950
        // Predicated region
        $region45: #{tpu_custom_call.1} parent=31 // pred_check
          %p952 = pneg %p107
        $region46: #{tpu_custom_call.1} parent=31 // pred_check_branch
          %954 = sbr.rel (%p952) target = $region48
        $region47: #{tpu_custom_call.1} parent=31 // pred_region
          %s956 = ssub.s32 128, 128
          %957 = vsyncadd %s948, %s956
          %s958 = smul.addr %s21, 128
          %s959 = scalar_lea.hbm %s3, %s958
          %s961 = sshll.u32 %s951, 4
          %s962 = int_to_ptr.vmem [resolvable:$true] %s961
          %964 = dma.vmem_to_hbm [thread:$0]  %s962, 128, %s959, %s948
        $region48: #{tpu_custom_call.1} parent=31 // pred_fallthru
          _
      $region32: #{tpu_custom_call.1} parent=5 // pred_fallthru
        _
      %p965 = scmp.le.s32.totalorder 2, %s16
      // Predicated region
      $region49: #{tpu_custom_call.1} parent=5 // pred_check
        %p966 = pneg %p965
      $region50: #{tpu_custom_call.1} parent=5 // pred_check_branch
        %968 = sbr.rel (%p966) target = $region52
      $region51: #{tpu_custom_call.1} parent=5 // pred_region
        %s969 = ssub.s32 %s16, 2
        // Predicated region
        $region53: #{tpu_custom_call.1} parent=51 // pred_check
          %p970 = pneg %p113
        $region54: #{tpu_custom_call.1} parent=51 // pred_check_branch
          %972 = sbr.rel (%p970) target = $region56
        $region55: #{tpu_custom_call.1} parent=51 // pred_region
          %s973 = sand.u32 %s98, 1
          %s974 = scalar_lea.sflag [#allocation4], %s973
          %s975 = sand.u32 %s98, 1
          %s976 = smul.addr %s975, 8
          %s977 = scalar_lea.vmem [#allocation8], %s976
          %978 = dma.done %s974, 128
        $region56: #{tpu_custom_call.1} parent=51 // pred_fallthru
          _
      $region52: #{tpu_custom_call.1} parent=5 // pred_fallthru
        _
    $region6: #{tpu_custom_call.1} parent=1 // loop_footer
      %s20 = sadd.s32 1, %s16
    $region7: #{tpu_custom_call.1} parent=1 // loop_footer_branch
      %15 = sbr.rel target = $region3
    $region8: #{tpu_custom_call.1} parent=1 // loop_exit
      _
    %979 = vsyncpa [#allocation3], 1
    %s980 = scalar_lea.sflag [#allocation3], 1
    %981 = vsyncpa %s980, 1
    %982 = vsyncpa [#allocation6], 1
    %983 = vsyncpa [#allocation4], 1
    %s984 = scalar_lea.sflag [#allocation4], 1
    %985 = vsyncpa %s984, 1

</llo_original>
